<compile_context>
chip_gen: v7x
topology: tpu7x:2x2x1
jax: 0.10.0
libtpu: 0.0.40
codegen_flags: <defaults>
</compile_context>

<pallas_src>
import jax
import jax.numpy as jnp
from jax.experimental import pallas as pl
from jax.experimental.pallas import tpu as pltpu


def _mlp_kernel(x_ref, w1_ref, b1_ref, w2_ref, b2_ref, w3_ref, b3_ref, o_ref):
    # ---- Layer 1 on the VPU: K=4 is too shallow to be worth an MXU round-trip.
    x = x_ref[...]                              # f32 (tb, in_dim)
    w1 = w1_ref[...]                            # f32 (in_dim, hidden)
    in_dim = x.shape[1]                         # static (4) -> unrolled Python loop
    h1 = x[:, 0:1] * w1[0:1, :]
    for k in range(1, in_dim):
        h1 = h1 + x[:, k:k + 1] * w1[k:k + 1, :]
    h1 = jnp.maximum(h1 + b1_ref[...], 0.0)     # f32 (tb, hidden)

    # ---- Layer 2 on the MXU: bf16 operands, f32 accumulation.
    h2 = jnp.dot(h1.astype(jnp.bfloat16), w2_ref[...],
                 preferred_element_type=jnp.float32)
    h2 = jnp.maximum(h2 + b2_ref[...], 0.0)     # f32 (tb, hidden)

    # ---- Layer 3 on the MXU: store the real (tb, out_dim) columns directly.
    out = jnp.dot(h2.astype(jnp.bfloat16), w3_ref[...],
                  preferred_element_type=jnp.float32) + b3_ref[...]
    o_ref[...] = out.astype(o_ref.dtype)


def _round_up(n, m):
    return ((n + m - 1) // m) * m


def _choose_block_b(B, cap=4096):
    """Pick the batch tile (rows per grid step), always a multiple of 8.

    - Whole (8-rounded) batch in a single block when it fits the cap: the grid is a
      serial loop on v5e/v6e so extra steps only add overhead, and on v7x the cost
      of one idle core at these small sizes is negligible.
    - Batches above the cap are split into an EVEN number of steps so the
      'parallel' axis shards evenly across v7x's two TensorCores.
    The wrapper zero-pads the batch to a multiple of the tile, so any B is legal.
    """
    bb = _round_up(B, 8)
    if bb <= cap:
        return bb
    steps = pl.cdiv(B, cap)
    if steps % 2:
        steps += 1
    return _round_up(pl.cdiv(B, steps), 8)


def metabolic_nn_forward(x, params, *, block_b=None):
    """Fused 3-layer MLP forward pass on TPU via Pallas.

    x: (B, input_size) float32
    params: dict with w1 (in,h), b1 (1,h), w2 (h,h), b2 (1,h), w3 (h,out), b3 (1,out)
    """
    w1, b1, w2, b2, w3, b3 = (params[k] for k in ("w1", "b1", "w2", "b2", "w3", "b3"))
    B, in_dim = x.shape
    hidden = w1.shape[1]
    out_dim = w3.shape[1]

    if block_b is None:
        block_b = _choose_block_b(B)
    assert block_b % 8 == 0, "block_b must be a multiple of 8 (sublane tiling)"

    # Zero-pad the batch so every grid step is a full tile (padding sliced off below).
    B_pad = _round_up(B, block_b)
    x_in = x.astype(jnp.float32)
    if B_pad != B:
        x_in = jnp.pad(x_in, ((0, B_pad - B), (0, 0)))
    grid = (B_pad // block_b,)

    # bf16 weight operands for the MXU (halved DMA bytes); biases stay f32 and are
    # added post-accumulation.  These casts constant-fold under jit.
    w1_f = w1.astype(jnp.float32)
    w2_bf = w2.astype(jnp.bfloat16)
    w3_bf = w3.astype(jnp.bfloat16)
    b1_f = b1.astype(jnp.float32)
    b2_f = b2.astype(jnp.float32)
    b3_f = b3.astype(jnp.float32)

    out = pl.pallas_call(
        _mlp_kernel,
        out_shape=jax.ShapeDtypeStruct((B_pad, out_dim), jnp.float32),
        grid_spec=pltpu.PrefetchScalarGridSpec(
            num_scalar_prefetch=0,
            grid=grid,
            in_specs=[
                pl.BlockSpec((block_b, in_dim), lambda i: (i, 0)),   # x tile (f32)
                pl.BlockSpec((in_dim, hidden), lambda i: (0, 0)),    # w1 (resident)
                pl.BlockSpec((1, hidden), lambda i: (0, 0)),         # b1
                pl.BlockSpec((hidden, hidden), lambda i: (0, 0)),    # w2 (resident)
                pl.BlockSpec((1, hidden), lambda i: (0, 0)),         # b2
                pl.BlockSpec((hidden, out_dim), lambda i: (0, 0)),   # w3 (resident)
                pl.BlockSpec((1, out_dim), lambda i: (0, 0)),        # b3
            ],
            out_specs=pl.BlockSpec((block_b, out_dim), lambda i: (i, 0)),
        ),
        compiler_params=pltpu.CompilerParams(
            dimension_semantics=("parallel",),
            # ~12.5 MiB live at block_b=4096 (h1/h2 f32 + bf16 copies + I/O blocks);
            # 48 MiB gives headroom yet stays under v7x's 64 MiB/TC physical VMEM.
            vmem_limit_bytes=48 * 1024 * 1024,
        ),
    )(x_in, w1_f, b1_f, w2_bf, b2_f, w3_bf, b3_f)

    if B_pad != B:
        out = out[:B]
    return out.astype(x.dtype)


def init_params(key, input_size=4, hidden_size=256, output_size=4):
    """Deterministic init mimicking PyTorch nn.Linear default
    (uniform in [-1/sqrt(fan_in), 1/sqrt(fan_in)])."""
    def linear(k, fan_in, fan_out):
        kw, kb = jax.random.split(k)
        bound = 1.0 / jnp.sqrt(fan_in)
        w = jax.random.uniform(kw, (fan_in, fan_out), jnp.float32, -bound, bound)
        b = jax.random.uniform(kb, (1, fan_out), jnp.float32, -bound, bound)
        return w, b

    k1, k2, k3 = jax.random.split(key, 3)
    w1, b1 = linear(k1, input_size, hidden_size)
    w2, b2 = linear(k2, hidden_size, hidden_size)
    w3, b3 = linear(k3, hidden_size, output_size)
    return {"w1": w1, "b1": b1, "w2": w2, "b2": b2, "w3": w3, "b3": b3}


def _reference_forward(x, p):
    """Pure-JAX reference mirroring the kernel's mixed precision
    (f32 layer 1, bf16 MXU operands for layers 2/3, f32 accumulation/biases)."""
    f32, bf16 = jnp.float32, jnp.bfloat16
    w2 = p["w2"].astype(bf16).astype(f32)
    w3 = p["w3"].astype(bf16).astype(f32)
    h1 = jnp.maximum(x.astype(f32) @ p["w1"] + p["b1"], 0.0)
    h2 = jnp.maximum(h1.astype(bf16).astype(f32) @ w2 + p["b2"], 0.0)
    return h2.astype(bf16).astype(f32) @ w3 + p["b3"]


if __name__ == "__main__":
    key = jax.random.PRNGKey(0)
    k_params, k_x = jax.random.split(key)

    input_size, hidden_size, output_size = 4, 256, 4
    batch = 64

    params = init_params(k_params, input_size, hidden_size, output_size)
    x = jax.random.normal(k_x, (batch, input_size), jnp.float32)

    # Default path: single full-batch block (grid=(1,)).
    out = jax.block_until_ready(metabolic_nn_forward(x, params))
    ref = _reference_forward(x, params)
    assert out.shape == (batch, output_size)
    assert jnp.allclose(out, ref, atol=2e-2, rtol=2e-2), float(jnp.max(jnp.abs(out - ref)))

    # Multi-step grid path (exercises the batch-tiled pipeline).
    out2 = jax.block_until_ready(metabolic_nn_forward(x, params, block_b=16))
    assert jnp.allclose(out2, ref, atol=2e-2, rtol=2e-2)

    # Awkward batch size (not a multiple of 8) -> padded tile path.
    x_odd = jax.random.normal(k_x, (13, input_size), jnp.float32)
    out_odd = jax.block_until_ready(metabolic_nn_forward(x_odd, params))
    assert out_odd.shape == (13, output_size)
    assert jnp.allclose(out_odd, _reference_forward(x_odd, params), atol=2e-2, rtol=2e-2)

    print("KERNEL_OK")
</pallas_src>

<mosaic_0001>
module attributes {stable_mosaic.version = 11 : i64} {
  func.func @_mlp_kernel(%arg0: i32, %arg1: memref<64x4xf32, #tpu.memory_space<vmem>>, %arg2: memref<4x256xf32, #tpu.memory_space<vmem>>, %arg3: memref<1x256xf32, #tpu.memory_space<vmem>>, %arg4: memref<256x256xbf16, #tpu.memory_space<vmem>>, %arg5: memref<1x256xf32, #tpu.memory_space<vmem>>, %arg6: memref<256x4xbf16, #tpu.memory_space<vmem>>, %arg7: memref<1x4xf32, #tpu.memory_space<vmem>>, %arg8: memref<64x4xf32, #tpu.memory_space<vmem>>) attributes {dimension_semantics = [#tpu.dimension_semantics<parallel>], iteration_bounds = array<i64: 1>, scalar_prefetch = 0 : i64, scratch_operands = 0 : i64, tpu.core_type = #tpu.core_type<tc>, window_params = [{transform_indices = @transform_0, window_bounds = array<i64: 64, 4>}, {pipeline_mode = #tpu.pipeline_mode<synchronous>, transform_indices = @transform_1, window_bounds = array<i64: 4, 256>}, {pipeline_mode = #tpu.pipeline_mode<synchronous>, transform_indices = @transform_2, window_bounds = array<i64: 1, 256>}, {pipeline_mode = #tpu.pipeline_mode<synchronous>, transform_indices = @transform_3, window_bounds = array<i64: 256, 256>}, {pipeline_mode = #tpu.pipeline_mode<synchronous>, transform_indices = @transform_4, window_bounds = array<i64: 1, 256>}, {pipeline_mode = #tpu.pipeline_mode<synchronous>, transform_indices = @transform_5, window_bounds = array<i64: 256, 4>}, {pipeline_mode = #tpu.pipeline_mode<synchronous>, transform_indices = @transform_6, window_bounds = array<i64: 1, 4>}, {transform_indices = @transform_7, window_bounds = array<i64: 64, 4>}]} {
    %c0 = arith.constant 0 : index
    %c0_0 = arith.constant 0 : index
    %0 = vector.load %arg1[%c0, %c0_0] : memref<64x4xf32, #tpu.memory_space<vmem>>, vector<64x4xf32>
    %c0_1 = arith.constant 0 : index
    %c0_2 = arith.constant 0 : index
    %1 = vector.load %arg2[%c0_1, %c0_2] : memref<4x256xf32, #tpu.memory_space<vmem>>, vector<4x256xf32>
    %2 = vector.extract_strided_slice %0 {offsets = [0, 0], sizes = [64, 1], strides = [1, 1]} : vector<64x4xf32> to vector<64x1xf32>
    %3 = vector.extract_strided_slice %1 {offsets = [0, 0], sizes = [1, 256], strides = [1, 1]} : vector<4x256xf32> to vector<1x256xf32>
    %4 = vector.broadcast %2 : vector<64x1xf32> to vector<64x256xf32>
    %5 = vector.broadcast %3 : vector<1x256xf32> to vector<64x256xf32>
    %6 = arith.mulf %4, %5 : vector<64x256xf32>
    %7 = vector.extract_strided_slice %0 {offsets = [0, 1], sizes = [64, 1], strides = [1, 1]} : vector<64x4xf32> to vector<64x1xf32>
    %8 = vector.extract_strided_slice %1 {offsets = [1, 0], sizes = [1, 256], strides = [1, 1]} : vector<4x256xf32> to vector<1x256xf32>
    %9 = vector.broadcast %7 : vector<64x1xf32> to vector<64x256xf32>
    %10 = vector.broadcast %8 : vector<1x256xf32> to vector<64x256xf32>
    %11 = arith.mulf %9, %10 : vector<64x256xf32>
    %12 = arith.addf %6, %11 : vector<64x256xf32>
    %13 = vector.extract_strided_slice %0 {offsets = [0, 2], sizes = [64, 1], strides = [1, 1]} : vector<64x4xf32> to vector<64x1xf32>
    %14 = vector.extract_strided_slice %1 {offsets = [2, 0], sizes = [1, 256], strides = [1, 1]} : vector<4x256xf32> to vector<1x256xf32>
    %15 = vector.broadcast %13 : vector<64x1xf32> to vector<64x256xf32>
    %16 = vector.broadcast %14 : vector<1x256xf32> to vector<64x256xf32>
    %17 = arith.mulf %15, %16 : vector<64x256xf32>
    %18 = arith.addf %12, %17 : vector<64x256xf32>
    %19 = vector.extract_strided_slice %0 {offsets = [0, 3], sizes = [64, 1], strides = [1, 1]} : vector<64x4xf32> to vector<64x1xf32>
    %20 = vector.extract_strided_slice %1 {offsets = [3, 0], sizes = [1, 256], strides = [1, 1]} : vector<4x256xf32> to vector<1x256xf32>
    %21 = vector.broadcast %19 : vector<64x1xf32> to vector<64x256xf32>
    %22 = vector.broadcast %20 : vector<1x256xf32> to vector<64x256xf32>
    %23 = arith.mulf %21, %22 : vector<64x256xf32>
    %24 = arith.addf %18, %23 : vector<64x256xf32>
    %c0_3 = arith.constant 0 : index
    %c0_4 = arith.constant 0 : index
    %25 = vector.load %arg3[%c0_3, %c0_4] : memref<1x256xf32, #tpu.memory_space<vmem>>, vector<1x256xf32>
    %26 = vector.broadcast %25 : vector<1x256xf32> to vector<64x256xf32>
    %27 = arith.addf %24, %26 : vector<64x256xf32>
    %cst = arith.constant 0.000000e+00 : f32
    %28 = vector.broadcast %cst : f32 to vector<64x256xf32>
    %29 = arith.maximumf %27, %28 : vector<64x256xf32>
    %30 = arith.truncf %29 : vector<64x256xf32> to vector<64x256xbf16>
    %c0_5 = arith.constant 0 : index
    %c0_6 = arith.constant 0 : index
    %31 = vector.load %arg4[%c0_5, %c0_6] : memref<256x256xbf16, #tpu.memory_space<vmem>>, vector<256x256xbf16>
    %cst_7 = arith.constant dense<0.000000e+00> : vector<64x256xf32>
    %32 = tpu.matmul %30, %31, %cst_7 {dimension_numbers = #tpu.dot_dimension_numbers<[1], [0], [0], [1], [0, 0, 1, 1], [], []>} : vector<64x256xbf16>, vector<256x256xbf16>, vector<64x256xf32> -> vector<64x256xf32>
    %c0_8 = arith.constant 0 : index
    %c0_9 = arith.constant 0 : index
    %33 = vector.load %arg5[%c0_8, %c0_9] : memref<1x256xf32, #tpu.memory_space<vmem>>, vector<1x256xf32>
    %34 = vector.broadcast %33 : vector<1x256xf32> to vector<64x256xf32>
    %35 = arith.addf %32, %34 : vector<64x256xf32>
    %cst_10 = arith.constant 0.000000e+00 : f32
    %36 = vector.broadcast %cst_10 : f32 to vector<64x256xf32>
    %37 = arith.maximumf %35, %36 : vector<64x256xf32>
    %38 = arith.truncf %37 : vector<64x256xf32> to vector<64x256xbf16>
    %c0_11 = arith.constant 0 : index
    %c0_12 = arith.constant 0 : index
    %39 = vector.load %arg6[%c0_11, %c0_12] : memref<256x4xbf16, #tpu.memory_space<vmem>>, vector<256x4xbf16>
    %cst_13 = arith.constant dense<0.000000e+00> : vector<64x4xf32>
    %40 = tpu.matmul %38, %39, %cst_13 {dimension_numbers = #tpu.dot_dimension_numbers<[1], [0], [0], [1], [0, 0, 1, 1], [], []>} : vector<64x256xbf16>, vector<256x4xbf16>, vector<64x4xf32> -> vector<64x4xf32>
    %c0_14 = arith.constant 0 : index
    %c0_15 = arith.constant 0 : index
    %41 = vector.load %arg7[%c0_14, %c0_15] : memref<1x4xf32, #tpu.memory_space<vmem>>, vector<1x4xf32>
    %42 = vector.broadcast %41 : vector<1x4xf32> to vector<64x4xf32>
    %43 = arith.addf %40, %42 : vector<64x4xf32>
    %c0_16 = arith.constant 0 : index
    %c0_17 = arith.constant 0 : index
    %44 = vector.load %arg8[%c0_16, %c0_17] : memref<64x4xf32, #tpu.memory_space<vmem>>, vector<64x4xf32>
    tpu.vector_store %arg8[%c0_16, %c0_17], %43 {strides = array<i32>} : memref<64x4xf32, #tpu.memory_space<vmem>>, vector<64x4xf32>,
    return
  }
  func.func @transform_0(%arg0: i32) -> (i32, i32) {
    %c0_i32 = arith.constant 0 : i32
    %c0_i32_0 = arith.constant 0 : i32
    return %arg0, %c0_i32 : i32, i32
  }
  func.func @transform_1(%arg0: i32) -> (i32, i32) {
    %c0_i32 = arith.constant 0 : i32
    %c0_i32_0 = arith.constant 0 : i32
    %c0_i32_1 = arith.constant 0 : i32
    return %c0_i32, %c0_i32_0 : i32, i32
  }
  func.func @transform_2(%arg0: i32) -> (i32, i32) {
    %c0_i32 = arith.constant 0 : i32
    %c0_i32_0 = arith.constant 0 : i32
    %c0_i32_1 = arith.constant 0 : i32
    return %c0_i32, %c0_i32_0 : i32, i32
  }
  func.func @transform_3(%arg0: i32) -> (i32, i32) {
    %c0_i32 = arith.constant 0 : i32
    %c0_i32_0 = arith.constant 0 : i32
    %c0_i32_1 = arith.constant 0 : i32
    return %c0_i32, %c0_i32_0 : i32, i32
  }
  func.func @transform_4(%arg0: i32) -> (i32, i32) {
    %c0_i32 = arith.constant 0 : i32
    %c0_i32_0 = arith.constant 0 : i32
    %c0_i32_1 = arith.constant 0 : i32
    return %c0_i32, %c0_i32_0 : i32, i32
  }
  func.func @transform_5(%arg0: i32) -> (i32, i32) {
    %c0_i32 = arith.constant 0 : i32
    %c0_i32_0 = arith.constant 0 : i32
    %c0_i32_1 = arith.constant 0 : i32
    return %c0_i32, %c0_i32_0 : i32, i32
  }
  func.func @transform_6(%arg0: i32) -> (i32, i32) {
    %c0_i32 = arith.constant 0 : i32
    %c0_i32_0 = arith.constant 0 : i32
    %c0_i32_1 = arith.constant 0 : i32
    return %c0_i32, %c0_i32_0 : i32, i32
  }
  func.func @transform_7(%arg0: i32) -> (i32, i32) {
    %c0_i32 = arith.constant 0 : i32
    %c0_i32_0 = arith.constant 0 : i32
    return %arg0, %c0_i32 : i32, i32
  }
}

</mosaic_0001>

<llo_original>
// kernel: tpu_custom_call.1
$region0: #{tpu_custom_call.1}
  #allocation0 [shape = 'u32[]', space=smem, size = 0x4, offset = 0x4, fixed_abs, tag = 'smem constant byte address 0x4 - core index']
  #allocation1 [shape = 'u32[144,128]{1,0:T(1,128)}', space=vmem, size = 0x12000, scoped, tag = 'internal scratch']
  %s0 = inlined_call_operand.vmem [shape: f32[64,4], index: 0, kind: input, shape index: {}]
  %s1 = inlined_call_operand.vmem [shape: f32[4,256], index: 1, kind: input, shape index: {}]
  %s2 = inlined_call_operand.vmem [shape: f32[1,256], index: 2, kind: input, shape index: {}]
  %s3 = inlined_call_operand.hbm [shape: bf16[256,256], index: 3, kind: input, shape index: {}]
  %s4 = inlined_call_operand.vmem [shape: f32[1,256], index: 4, kind: input, shape index: {}]
  %s5 = inlined_call_operand.vmem [shape: bf16[256,4], index: 5, kind: input, shape index: {}]
  %s6 = inlined_call_operand.vmem [shape: f32[1,4], index: 6, kind: input, shape index: {}]
  %s7 = inlined_call_operand.vmem [shape: f32[64,4], index: 7, kind: output, shape index: {}]
  %s8 = sld [smem:[#allocation0]]
  $region42: #{tpu_custom_call.1} parent=0
    _
  %s10 = ssub.s32 1, %s8
  %s11 = scalar_select 0, %s10, %s8
  $region1: #{tpu_custom_call.1} parent=0
    #allocation2 [shape = 'u8[131072]{0}', space=vmem, size = 0x20000, scoped, tag = 'input window, operand 3, single buffered']
    #allocation3 [shape = 's32[1]{0}', space=sflag, size = 0x4, scoped, tag = 'scoped memory for tpu_custom_call.1']
    %12 = vsyncpa [#allocation3], 0
    // Predicated region
    $region2: #{tpu_custom_call.1} parent=1 // pred_check
      _
    $region3: #{tpu_custom_call.1} parent=1 // pred_check_branch
      %14 = sbr.rel (0) target = $region5
    $region4: #{tpu_custom_call.1} parent=1 // pred_region
      _
    $region5: #{tpu_custom_call.1} parent=1 // pred_fallthru
      _
    // Predicated region
    $region6: #{tpu_custom_call.1} parent=1 // pred_check
      _
    $region7: #{tpu_custom_call.1} parent=1 // pred_check_branch
      %16 = sbr.rel (0) target = $region9
    $region8: #{tpu_custom_call.1} parent=1 // pred_region
      _
    $region9: #{tpu_custom_call.1} parent=1 // pred_fallthru
      _
    // Predicated region
    $region10: #{tpu_custom_call.1} parent=1 // pred_check
      _
    $region11: #{tpu_custom_call.1} parent=1 // pred_check_branch
      %18 = sbr.rel (0) target = $region13
    $region12: #{tpu_custom_call.1} parent=1 // pred_region
      _
    $region13: #{tpu_custom_call.1} parent=1 // pred_fallthru
      _
    // Predicated region
    $region14: #{tpu_custom_call.1} parent=1 // pred_check
      _
    $region15: #{tpu_custom_call.1} parent=1 // pred_check_branch
      %20 = sbr.rel (0) target = $region17
    $region16: #{tpu_custom_call.1} parent=1 // pred_region
      %s22 = ssub.s32 4096, 4096
      %23 = vsyncadd [#allocation3], %s22
      %s24 = sshll.u32 [#allocation2], 4
      %s25 = int_to_ptr.vmem [resolvable:$true] %s24
      %30 = dma.hbm_to_vmem [thread:$0]  %s3, 4096, %s25, [#allocation3], 128, 128, 8
    $region17: #{tpu_custom_call.1} parent=1 // pred_fallthru
      _
    // Predicated region
    $region18: #{tpu_custom_call.1} parent=1 // pred_check
      _
    $region19: #{tpu_custom_call.1} parent=1 // pred_check_branch
      %32 = sbr.rel (0) target = $region21
    $region20: #{tpu_custom_call.1} parent=1 // pred_region
      _
    $region21: #{tpu_custom_call.1} parent=1 // pred_fallthru
      _
    // Predicated region
    $region22: #{tpu_custom_call.1} parent=1 // pred_check
      _
    $region23: #{tpu_custom_call.1} parent=1 // pred_check_branch
      %34 = sbr.rel (0) target = $region25
    $region24: #{tpu_custom_call.1} parent=1 // pred_region
      _
    $region25: #{tpu_custom_call.1} parent=1 // pred_fallthru
      _
    // Predicated region
    $region26: #{tpu_custom_call.1} parent=1 // pred_check
      _
    $region27: #{tpu_custom_call.1} parent=1 // pred_check_branch
      %36 = sbr.rel (0) target = $region29
    $region28: #{tpu_custom_call.1} parent=1 // pred_region
      _
    $region29: #{tpu_custom_call.1} parent=1 // pred_fallthru
      _
    // Predicated region
    $region30: #{tpu_custom_call.1} parent=1 // pred_check
      _
    $region31: #{tpu_custom_call.1} parent=1 // pred_check_branch
      %38 = sbr.rel (0) target = $region33
    $region32: #{tpu_custom_call.1} parent=1 // pred_region
      %39 = dma.done [#allocation3], 4096
    $region33: #{tpu_custom_call.1} parent=1 // pred_fallthru
      _
    %v41 = vld [vmem:[%s0] sm:$0xff]
    %v42 = vld [vmem:[%s0 + $0x8] sm:$0xff]
    %v43 = vld [vmem:[%s0 + $0x10] sm:$0xff]
    %v44 = vld [vmem:[%s0 + $0x18] sm:$0xff]
    %v45 = vld [vmem:[%s0 + $0x20] sm:$0xff]
    %v46 = vld [vmem:[%s0 + $0x28] sm:$0xff]
    %v47 = vld [vmem:[%s0 + $0x30] sm:$0xff]
    %v48 = vld [vmem:[%s0 + $0x38] sm:$0xff]
    %v49 = vld [vmem:[%s1] sm:$0xff]
    %51 = vset.pattern.permute.xlu0 0
    %52 = vperm.xlu0 %51, %v41
    %v53 = vpop.permute.xlu0 %52
    %56 = vset.pattern.permute.xlu0 0
    %57 = vperm.xlu0 %56, %v42
    %v58 = vpop.permute.xlu0 %57
    %61 = vset.pattern.permute.xlu0 0
    %62 = vperm.xlu0 %61, %v43
    %v63 = vpop.permute.xlu0 %62
    %66 = vset.pattern.permute.xlu0 0
    %67 = vperm.xlu0 %66, %v44
    %v68 = vpop.permute.xlu0 %67
    %71 = vset.pattern.permute.xlu0 0
    %72 = vperm.xlu0 %71, %v45
    %v73 = vpop.permute.xlu0 %72
    %76 = vset.pattern.permute.xlu0 0
    %77 = vperm.xlu0 %76, %v46
    %v78 = vpop.permute.xlu0 %77
    %81 = vset.pattern.permute.xlu0 0
    %82 = vperm.xlu0 %81, %v47
    %v83 = vpop.permute.xlu0 %82
    %86 = vset.pattern.permute.xlu0 0
    %87 = vperm.xlu0 %86, %v48
    %v88 = vpop.permute.xlu0 %87
    %v91 = vlaneseq
    %v92 = vshrl.u32 %v91, 7
    %v93 = vsub.s32 0, %v92
    %v94 = vrot.slane %v49, %v93
    %v95 = vlaneseq
    %v96 = vshrl.u32 %v95, 7
    %v97 = vsub.s32 4, %v96
    %v98 = vrot.slane %v49, %v97
    %v101 = vlaneseq
    %v102 = vshrl.u32 %v101, 7
    %v103 = vsub.s32 0, %v102
    %v104 = vrot.slane %v94, %v103
    %v105 = vlaneseq
    %v106 = vshrl.u32 %v105, 7
    %v107 = vsub.s32 0, %v106
    %v108 = vrot.slane %v98, %v107
    %v109 = vmul.f32 %v53, %v104
    %v110 = vmul.f32 %v53, %v108
    %v111 = vmul.f32 %v58, %v104
    %v112 = vmul.f32 %v58, %v108
    %v113 = vmul.f32 %v63, %v104
    %v114 = vmul.f32 %v63, %v108
    %v115 = vmul.f32 %v68, %v104
    %v116 = vmul.f32 %v68, %v108
    %v117 = vmul.f32 %v73, %v104
    %v118 = vmul.f32 %v73, %v108
    %v119 = vmul.f32 %v78, %v104
    %v120 = vmul.f32 %v78, %v108
    %v121 = vmul.f32 %v83, %v104
    %v122 = vmul.f32 %v83, %v108
    %v123 = vmul.f32 %v88, %v104
    %v124 = vmul.f32 %v88, %v108
    %125 = vset.pattern.permute.xlu0 1
    %126 = vperm.xlu0 %125, %v41
    %v127 = vpop.permute.xlu0 %126
    %129 = vset.pattern.permute.xlu0 1
    %130 = vperm.xlu0 %129, %v42
    %v131 = vpop.permute.xlu0 %130
    %133 = vset.pattern.permute.xlu0 1
    %134 = vperm.xlu0 %133, %v43
    %v135 = vpop.permute.xlu0 %134
    %137 = vset.pattern.permute.xlu0 1
    %138 = vperm.xlu0 %137, %v44
    %v139 = vpop.permute.xlu0 %138
    %141 = vset.pattern.permute.xlu0 1
    %142 = vperm.xlu0 %141, %v45
    %v143 = vpop.permute.xlu0 %142
    %145 = vset.pattern.permute.xlu0 1
    %146 = vperm.xlu0 %145, %v46
    %v147 = vpop.permute.xlu0 %146
    %149 = vset.pattern.permute.xlu0 1
    %150 = vperm.xlu0 %149, %v47
    %v151 = vpop.permute.xlu0 %150
    %153 = vset.pattern.permute.xlu0 1
    %154 = vperm.xlu0 %153, %v48
    %v155 = vpop.permute.xlu0 %154
    %v157 = vlaneseq
    %v158 = vshrl.u32 %v157, 7
    %v159 = vsub.s32 1, %v158
    %v160 = vrot.slane %v49, %v159
    %v161 = vlaneseq
    %v162 = vshrl.u32 %v161, 7
    %v163 = vsub.s32 5, %v162
    %v164 = vrot.slane %v49, %v163
    %v167 = vlaneseq
    %v168 = vshrl.u32 %v167, 7
    %v169 = vsub.s32 1, %v168
    %v170 = vrot.slane %v160, %v169
    %v171 = vlaneseq
    %v172 = vshrl.u32 %v171, 7
    %v173 = vsub.s32 1, %v172
    %v174 = vrot.slane %v164, %v173
    %v175 = vmul.f32 %v127, %v170
    %v176 = vmul.f32 %v127, %v174
    %v177 = vmul.f32 %v131, %v170
    %v178 = vmul.f32 %v131, %v174
    %v179 = vmul.f32 %v135, %v170
    %v180 = vmul.f32 %v135, %v174
    %v181 = vmul.f32 %v139, %v170
    %v182 = vmul.f32 %v139, %v174
    %v183 = vmul.f32 %v143, %v170
    %v184 = vmul.f32 %v143, %v174
    %v185 = vmul.f32 %v147, %v170
    %v186 = vmul.f32 %v147, %v174
    %v187 = vmul.f32 %v151, %v170
    %v188 = vmul.f32 %v151, %v174
    %v189 = vmul.f32 %v155, %v170
    %v190 = vmul.f32 %v155, %v174
    %v191 = vadd.f32 %v109, %v175
    %v192 = vadd.f32 %v110, %v176
    %v193 = vadd.f32 %v111, %v177
    %v194 = vadd.f32 %v112, %v178
    %v195 = vadd.f32 %v113, %v179
    %v196 = vadd.f32 %v114, %v180
    %v197 = vadd.f32 %v115, %v181
    %v198 = vadd.f32 %v116, %v182
    %v199 = vadd.f32 %v117, %v183
    %v200 = vadd.f32 %v118, %v184
    %v201 = vadd.f32 %v119, %v185
    %v202 = vadd.f32 %v120, %v186
    %v203 = vadd.f32 %v121, %v187
    %v204 = vadd.f32 %v122, %v188
    %v205 = vadd.f32 %v123, %v189
    %v206 = vadd.f32 %v124, %v190
    %207 = vset.pattern.permute.xlu0 2
    %208 = vperm.xlu0 %207, %v41
    %v209 = vpop.permute.xlu0 %208
    %211 = vset.pattern.permute.xlu0 2
    %212 = vperm.xlu0 %211, %v42
    %v213 = vpop.permute.xlu0 %212
    %215 = vset.pattern.permute.xlu0 2
    %216 = vperm.xlu0 %215, %v43
    %v217 = vpop.permute.xlu0 %216
    %219 = vset.pattern.permute.xlu0 2
    %220 = vperm.xlu0 %219, %v44
    %v221 = vpop.permute.xlu0 %220
    %223 = vset.pattern.permute.xlu0 2
    %224 = vperm.xlu0 %223, %v45
    %v225 = vpop.permute.xlu0 %224
    %227 = vset.pattern.permute.xlu0 2
    %228 = vperm.xlu0 %227, %v46
    %v229 = vpop.permute.xlu0 %228
    %231 = vset.pattern.permute.xlu0 2
    %232 = vperm.xlu0 %231, %v47
    %v233 = vpop.permute.xlu0 %232
    %235 = vset.pattern.permute.xlu0 2
    %236 = vperm.xlu0 %235, %v48
    %v237 = vpop.permute.xlu0 %236
    %v239 = vlaneseq
    %v240 = vshrl.u32 %v239, 7
    %v241 = vsub.s32 2, %v240
    %v242 = vrot.slane %v49, %v241
    %v243 = vlaneseq
    %v244 = vshrl.u32 %v243, 7
    %v245 = vsub.s32 6, %v244
    %v246 = vrot.slane %v49, %v245
    %v249 = vlaneseq
    %v250 = vshrl.u32 %v249, 7
    %v251 = vsub.s32 2, %v250
    %v252 = vrot.slane %v242, %v251
    %v253 = vlaneseq
    %v254 = vshrl.u32 %v253, 7
    %v255 = vsub.s32 2, %v254
    %v256 = vrot.slane %v246, %v255
    %v257 = vmul.f32 %v209, %v252
    %v258 = vmul.f32 %v209, %v256
    %v259 = vmul.f32 %v213, %v252
    %v260 = vmul.f32 %v213, %v256
    %v261 = vmul.f32 %v217, %v252
    %v262 = vmul.f32 %v217, %v256
    %v263 = vmul.f32 %v221, %v252
    %v264 = vmul.f32 %v221, %v256
    %v265 = vmul.f32 %v225, %v252
    %v266 = vmul.f32 %v225, %v256
    %v267 = vmul.f32 %v229, %v252
    %v268 = vmul.f32 %v229, %v256
    %v269 = vmul.f32 %v233, %v252
    %v270 = vmul.f32 %v233, %v256
    %v271 = vmul.f32 %v237, %v252
    %v272 = vmul.f32 %v237, %v256
    %v273 = vadd.f32 %v191, %v257
    %v274 = vadd.f32 %v192, %v258
    %v275 = vadd.f32 %v193, %v259
    %v276 = vadd.f32 %v194, %v260
    %v277 = vadd.f32 %v195, %v261
    %v278 = vadd.f32 %v196, %v262
    %v279 = vadd.f32 %v197, %v263
    %v280 = vadd.f32 %v198, %v264
    %v281 = vadd.f32 %v199, %v265
    %v282 = vadd.f32 %v200, %v266
    %v283 = vadd.f32 %v201, %v267
    %v284 = vadd.f32 %v202, %v268
    %v285 = vadd.f32 %v203, %v269
    %v286 = vadd.f32 %v204, %v270
    %v287 = vadd.f32 %v205, %v271
    %v288 = vadd.f32 %v206, %v272
    %289 = vset.pattern.permute.xlu0 3
    %290 = vperm.xlu0 %289, %v41
    %v291 = vpop.permute.xlu0 %290
    %293 = vset.pattern.permute.xlu0 3
    %294 = vperm.xlu0 %293, %v42
    %v295 = vpop.permute.xlu0 %294
    %297 = vset.pattern.permute.xlu0 3
    %298 = vperm.xlu0 %297, %v43
    %v299 = vpop.permute.xlu0 %298
    %301 = vset.pattern.permute.xlu0 3
    %302 = vperm.xlu0 %301, %v44
    %v303 = vpop.permute.xlu0 %302
    %305 = vset.pattern.permute.xlu0 3
    %306 = vperm.xlu0 %305, %v45
    %v307 = vpop.permute.xlu0 %306
    %309 = vset.pattern.permute.xlu0 3
    %310 = vperm.xlu0 %309, %v46
    %v311 = vpop.permute.xlu0 %310
    %313 = vset.pattern.permute.xlu0 3
    %314 = vperm.xlu0 %313, %v47
    %v315 = vpop.permute.xlu0 %314
    %317 = vset.pattern.permute.xlu0 3
    %318 = vperm.xlu0 %317, %v48
    %v319 = vpop.permute.xlu0 %318
    %v321 = vlaneseq
    %v322 = vshrl.u32 %v321, 7
    %v323 = vsub.s32 3, %v322
    %v324 = vrot.slane %v49, %v323
    %v325 = vlaneseq
    %v326 = vshrl.u32 %v325, 7
    %v327 = vsub.s32 7, %v326
    %v328 = vrot.slane %v49, %v327
    %v331 = vlaneseq
    %v332 = vshrl.u32 %v331, 7
    %v333 = vsub.s32 3, %v332
    %v334 = vrot.slane %v324, %v333
    %v335 = vlaneseq
    %v336 = vshrl.u32 %v335, 7
    %v337 = vsub.s32 3, %v336
    %v338 = vrot.slane %v328, %v337
    %v339 = vmul.f32 %v291, %v334
    %v340 = vmul.f32 %v291, %v338
    %v341 = vmul.f32 %v295, %v334
    %v342 = vmul.f32 %v295, %v338
    %v343 = vmul.f32 %v299, %v334
    %v344 = vmul.f32 %v299, %v338
    %v345 = vmul.f32 %v303, %v334
    %v346 = vmul.f32 %v303, %v338
    %v347 = vmul.f32 %v307, %v334
    %v348 = vmul.f32 %v307, %v338
    %v349 = vmul.f32 %v311, %v334
    %v350 = vmul.f32 %v311, %v338
    %v351 = vmul.f32 %v315, %v334
    %v352 = vmul.f32 %v315, %v338
    %v353 = vmul.f32 %v319, %v334
    %v354 = vmul.f32 %v319, %v338
    %v355 = vadd.f32 %v273, %v339
    %v356 = vadd.f32 %v274, %v340
    %v357 = vadd.f32 %v275, %v341
    %v358 = vadd.f32 %v276, %v342
    %v359 = vadd.f32 %v277, %v343
    %v360 = vadd.f32 %v278, %v344
    %v361 = vadd.f32 %v279, %v345
    %v362 = vadd.f32 %v280, %v346
    %v363 = vadd.f32 %v281, %v347
    %v364 = vadd.f32 %v282, %v348
    %v365 = vadd.f32 %v283, %v349
    %v366 = vadd.f32 %v284, %v350
    %v367 = vadd.f32 %v285, %v351
    %v368 = vadd.f32 %v286, %v352
    %v369 = vadd.f32 %v287, %v353
    %v370 = vadd.f32 %v288, %v354
    %v371 = vld [vmem:[%s2] sm:$0x3]
    %v373 = vlaneseq
    %v374 = vshrl.u32 %v373, 7
    %v375 = vsub.s32 0, %v374
    %v376 = vrot.slane %v371, %v375
    %v377 = vlaneseq
    %v378 = vshrl.u32 %v377, 7
    %v379 = vsub.s32 1, %v378
    %v380 = vrot.slane %v371, %v379
    %v383 = vadd.f32 %v355, %v376
    %v384 = vadd.f32 %v356, %v380
    %v385 = vadd.f32 %v357, %v376
    %v386 = vadd.f32 %v358, %v380
    %v387 = vadd.f32 %v359, %v376
    %v388 = vadd.f32 %v360, %v380
    %v389 = vadd.f32 %v361, %v376
    %v390 = vadd.f32 %v362, %v380
    %v391 = vadd.f32 %v363, %v376
    %v392 = vadd.f32 %v364, %v380
    %v393 = vadd.f32 %v365, %v376
    %v394 = vadd.f32 %v366, %v380
    %v395 = vadd.f32 %v367, %v376
    %v396 = vadd.f32 %v368, %v380
    %v397 = vadd.f32 %v369, %v376
    %v398 = vadd.f32 %v370, %v380
    %v399 = vmax.f32 %v383, 0.0
    %v400 = vmax.f32 %v384, 0.0
    %v401 = vmax.f32 %v385, 0.0
    %v402 = vmax.f32 %v386, 0.0
    %v403 = vmax.f32 %v387, 0.0
    %v404 = vmax.f32 %v388, 0.0
    %v405 = vmax.f32 %v389, 0.0
    %v406 = vmax.f32 %v390, 0.0
    %v407 = vmax.f32 %v391, 0.0
    %v408 = vmax.f32 %v392, 0.0
    %v409 = vmax.f32 %v393, 0.0
    %v410 = vmax.f32 %v394, 0.0
    %v411 = vmax.f32 %v395, 0.0
    %v412 = vmax.f32 %v396, 0.0
    %v413 = vmax.f32 %v397, 0.0
    %v414 = vmax.f32 %v398, 0.0
    %v415 = vpack.c.bf16 %v401, %v399
    %v416 = vpack.c.bf16 %v402, %v400
    %v417 = vpack.c.bf16 %v405, %v403
    %v418 = vpack.c.bf16 %v406, %v404
    %v419 = vpack.c.bf16 %v409, %v407
    %v420 = vpack.c.bf16 %v410, %v408
    %v421 = vpack.c.bf16 %v413, %v411
    %v422 = vpack.c.bf16 %v414, %v412
    %v423 = vld [vmem:[#allocation2] sm:$0xff]
    %v424 = vld [vmem:[#allocation2 + $0x8] sm:$0xff]
    %v425 = vld [vmem:[#allocation2 + $0x10] sm:$0xff]
    %v426 = vld [vmem:[#allocation2 + $0x18] sm:$0xff]
    %v427 = vld [vmem:[#allocation2 + $0x20] sm:$0xff]
    %v428 = vld [vmem:[#allocation2 + $0x28] sm:$0xff]
    %v429 = vld [vmem:[#allocation2 + $0x30] sm:$0xff]
    %v430 = vld [vmem:[#allocation2 + $0x38] sm:$0xff]
    %v431 = vld [vmem:[#allocation2 + $0x40] sm:$0xff]
    %v432 = vld [vmem:[#allocation2 + $0x48] sm:$0xff]
    %v433 = vld [vmem:[#allocation2 + $0x50] sm:$0xff]
    %v434 = vld [vmem:[#allocation2 + $0x58] sm:$0xff]
    %v435 = vld [vmem:[#allocation2 + $0x60] sm:$0xff]
    %v436 = vld [vmem:[#allocation2 + $0x68] sm:$0xff]
    %v437 = vld [vmem:[#allocation2 + $0x70] sm:$0xff]
    %v438 = vld [vmem:[#allocation2 + $0x78] sm:$0xff]
    %v439 = vld [vmem:[#allocation2 + $0x80] sm:$0xff]
    %v440 = vld [vmem:[#allocation2 + $0x88] sm:$0xff]
    %v441 = vld [vmem:[#allocation2 + $0x90] sm:$0xff]
    %v442 = vld [vmem:[#allocation2 + $0x98] sm:$0xff]
    %v443 = vld [vmem:[#allocation2 + $0xa0] sm:$0xff]
    %v444 = vld [vmem:[#allocation2 + $0xa8] sm:$0xff]
    %v445 = vld [vmem:[#allocation2 + $0xb0] sm:$0xff]
    %v446 = vld [vmem:[#allocation2 + $0xb8] sm:$0xff]
    %v447 = vld [vmem:[#allocation2 + $0xc0] sm:$0xff]
    %v448 = vld [vmem:[#allocation2 + $0xc8] sm:$0xff]
    %v449 = vld [vmem:[#allocation2 + $0xd0] sm:$0xff]
    %v450 = vld [vmem:[#allocation2 + $0xd8] sm:$0xff]
    %v451 = vld [vmem:[#allocation2 + $0xe0] sm:$0xff]
    %v452 = vld [vmem:[#allocation2 + $0xe8] sm:$0xff]
    %v453 = vld [vmem:[#allocation2 + $0xf0] sm:$0xff]
    %v454 = vld [vmem:[#allocation2 + $0xf8] sm:$0xff]
    %v455 = vld [vmem:[%s4] sm:$0x3]
    %v457 = vlaneseq
    %v458 = vshrl.u32 %v457, 7
    %v459 = vsub.s32 0, %v458
    %v460 = vrot.slane %v455, %v459
    %v461 = vlaneseq
    %v462 = vshrl.u32 %v461, 7
    %v463 = vsub.s32 1, %v462
    %v464 = vrot.slane %v455, %v463
    %v499 = vunpack.c.l.b16 %v423
    %v500 = vunpack.c.h.b16 %v423
    %v501 = vunpack.c.l.b16 %v424
    %v502 = vunpack.c.h.b16 %v424
    %v503 = vunpack.c.l.b16 %v425
    %v504 = vunpack.c.h.b16 %v425
    %v505 = vunpack.c.l.b16 %v426
    %v506 = vunpack.c.h.b16 %v426
    %v507 = vunpack.c.l.b16 %v427
    %v508 = vunpack.c.h.b16 %v427
    %v509 = vunpack.c.l.b16 %v428
    %v510 = vunpack.c.h.b16 %v428
    %v511 = vunpack.c.l.b16 %v429
    %v512 = vunpack.c.h.b16 %v429
    %v513 = vunpack.c.l.b16 %v430
    %v514 = vunpack.c.h.b16 %v430
    %v515 = vunpack.c.l.b16 %v431
    %v516 = vunpack.c.h.b16 %v431
    %v517 = vunpack.c.l.b16 %v432
    %v518 = vunpack.c.h.b16 %v432
    %v519 = vunpack.c.l.b16 %v433
    %v520 = vunpack.c.h.b16 %v433
    %v521 = vunpack.c.l.b16 %v434
    %v522 = vunpack.c.h.b16 %v434
    %v523 = vunpack.c.l.b16 %v435
    %v524 = vunpack.c.h.b16 %v435
    %v525 = vunpack.c.l.b16 %v436
    %v526 = vunpack.c.h.b16 %v436
    %v527 = vunpack.c.l.b16 %v437
    %v528 = vunpack.c.h.b16 %v437
    %v529 = vunpack.c.l.b16 %v438
    %v530 = vunpack.c.h.b16 %v438
    %v531 = vunpack.c.l.b16 %v439
    %v532 = vunpack.c.h.b16 %v439
    %v533 = vunpack.c.l.b16 %v440
    %v534 = vunpack.c.h.b16 %v440
    %v535 = vunpack.c.l.b16 %v441
    %v536 = vunpack.c.h.b16 %v441
    %v537 = vunpack.c.l.b16 %v442
    %v538 = vunpack.c.h.b16 %v442
    %v539 = vunpack.c.l.b16 %v443
    %v540 = vunpack.c.h.b16 %v443
    %v541 = vunpack.c.l.b16 %v444
    %v542 = vunpack.c.h.b16 %v444
    %v543 = vunpack.c.l.b16 %v445
    %v544 = vunpack.c.h.b16 %v445
    %v545 = vunpack.c.l.b16 %v446
    %v546 = vunpack.c.h.b16 %v446
    %v547 = vunpack.c.l.b16 %v447
    %v548 = vunpack.c.h.b16 %v447
    %v549 = vunpack.c.l.b16 %v448
    %v550 = vunpack.c.h.b16 %v448
    %v551 = vunpack.c.l.b16 %v449
    %v552 = vunpack.c.h.b16 %v449
    %v553 = vunpack.c.l.b16 %v450
    %v554 = vunpack.c.h.b16 %v450
    %v555 = vunpack.c.l.b16 %v451
    %v556 = vunpack.c.h.b16 %v451
    %v557 = vunpack.c.l.b16 %v452
    %v558 = vunpack.c.h.b16 %v452
    %v559 = vunpack.c.l.b16 %v453
    %v560 = vunpack.c.h.b16 %v453
    %v561 = vunpack.c.l.b16 %v454
    %v562 = vunpack.c.h.b16 %v454
    %v563 = vpack.c.b16 %v501, %v499
    %v564 = vpack.c.b16 %v502, %v500
    %v565 = vpack.c.b16 %v505, %v503
    %v566 = vpack.c.b16 %v506, %v504
    %v567 = vpack.c.b16 %v509, %v507
    %v568 = vpack.c.b16 %v510, %v508
    %v569 = vpack.c.b16 %v513, %v511
    %v570 = vpack.c.b16 %v514, %v512
    %v571 = vpack.c.b16 %v517, %v515
    %v572 = vpack.c.b16 %v518, %v516
    %v573 = vpack.c.b16 %v521, %v519
    %v574 = vpack.c.b16 %v522, %v520
    %v575 = vpack.c.b16 %v525, %v523
    %v576 = vpack.c.b16 %v526, %v524
    %v577 = vpack.c.b16 %v529, %v527
    %v578 = vpack.c.b16 %v530, %v528
    %v579 = vpack.c.b16 %v533, %v531
    %v580 = vpack.c.b16 %v534, %v532
    %v581 = vpack.c.b16 %v537, %v535
    %v582 = vpack.c.b16 %v538, %v536
    %v583 = vpack.c.b16 %v541, %v539
    %v584 = vpack.c.b16 %v542, %v540
    %v585 = vpack.c.b16 %v545, %v543
    %v586 = vpack.c.b16 %v546, %v544
    %v587 = vpack.c.b16 %v549, %v547
    %v588 = vpack.c.b16 %v550, %v548
    %v589 = vpack.c.b16 %v553, %v551
    %v590 = vpack.c.b16 %v554, %v552
    %v591 = vpack.c.b16 %v557, %v555
    %v592 = vpack.c.b16 %v558, %v556
    %v593 = vpack.c.b16 %v561, %v559
    %v594 = vpack.c.b16 %v562, %v560
    %627 = vmatprep.subr.bf16.mxu0 %v564
    %628 = vmatpush1.bf16.msra.mxu0 %v563
    %629 = vmatprep.subr.bf16.mxu0 %v566
    %630 = vmatpush1.bf16.msra.mxu0 %v565
    %631 = vmatprep.subr.bf16.mxu0 %v568
    %632 = vmatpush1.bf16.msra.mxu0 %v567
    %633 = vmatprep.subr.bf16.mxu0 %v570
    %634 = vmatpush1.bf16.msra.mxu0 %v569
    %635 = vmatprep.subr.bf16.mxu0 %v572
    %636 = vmatpush1.bf16.msra.mxu0 %v571
    %637 = vmatprep.subr.bf16.mxu0 %v574
    %638 = vmatpush1.bf16.msra.mxu0 %v573
    %639 = vmatprep.subr.bf16.mxu0 %v576
    %640 = vmatpush1.bf16.msra.mxu0 %v575
    %641 = vmatprep.subr.bf16.mxu0 %v578
    %642 = vmatpush1.bf16.msra.mxu0 %v577
    %643 = vmatprep.subr.bf16.mxu0 %v580
    %644 = vmatpush1.bf16.msra.mxu0 %v579
    %645 = vmatprep.subr.bf16.mxu0 %v582
    %646 = vmatpush1.bf16.msra.mxu0 %v581
    %647 = vmatprep.subr.bf16.mxu0 %v584
    %648 = vmatpush1.bf16.msra.mxu0 %v583
    %649 = vmatprep.subr.bf16.mxu0 %v586
    %650 = vmatpush1.bf16.msra.mxu0 %v585
    %651 = vmatprep.subr.bf16.mxu0 %v588
    %652 = vmatpush1.bf16.msra.mxu0 %v587
    %653 = vmatprep.subr.bf16.mxu0 %v590
    %654 = vmatpush1.bf16.msra.mxu0 %v589
    %655 = vmatprep.subr.bf16.mxu0 %v592
    %656 = vmatpush1.bf16.msra.mxu0 %v591
    %657 = vmatprep.subr.bf16.mxu0 %v594
    %658 = vmatpush1.bf16.msra.mxu0 %v593
    %659 = vmatprep.mubr.bf16.mxu0 %v416
    %660 = vmatmul.mubr.bf16.gmra.mrb[0].mxu0 %v415
    %v661 = vpop.f32.mrb[0].mxu0
    %v662 = vadd.f32 %v460, %v661
    %v663 = vpop.f32.mrb[0].mxu0
    %v664 = vadd.f32 %v464, %v663
    %v665 = vpop.f32.mrb[0].mxu0
    %v666 = vadd.f32 %v460, %v665
    %v667 = vpop.f32.mrb[0].mxu0
    %v668 = vadd.f32 %v464, %v667
    %669 = vmatprep.mubr.bf16.mxu0 %v418
    %670 = vmatmul.mubr.bf16.gmra.mrb[0].mxu0 %v417
    %v671 = vpop.f32.mrb[0].mxu0
    %v672 = vadd.f32 %v460, %v671
    %v673 = vpop.f32.mrb[0].mxu0
    %v674 = vadd.f32 %v464, %v673
    %v675 = vpop.f32.mrb[0].mxu0
    %v676 = vadd.f32 %v460, %v675
    %v677 = vpop.f32.mrb[0].mxu0
    %v678 = vadd.f32 %v464, %v677
    %679 = vmatprep.mubr.bf16.mxu0 %v420
    %680 = vmatmul.mubr.bf16.gmra.mrb[0].mxu0 %v419
    %v681 = vpop.f32.mrb[0].mxu0
    %v682 = vadd.f32 %v460, %v681
    %v683 = vpop.f32.mrb[0].mxu0
    %v684 = vadd.f32 %v464, %v683
    %v685 = vpop.f32.mrb[0].mxu0
    %v686 = vadd.f32 %v460, %v685
    %v687 = vpop.f32.mrb[0].mxu0
    %v688 = vadd.f32 %v464, %v687
    %689 = vmatprep.mubr.bf16.mxu0 %v422
    %690 = vmatmul.mubr.bf16.gmra.mrb[0].mxu0 %v421
    %v691 = vpop.f32.mrb[0].mxu0
    %v692 = vadd.f32 %v460, %v691
    %v693 = vpop.f32.mrb[0].mxu0
    %v694 = vadd.f32 %v464, %v693
    %v695 = vpop.f32.mrb[0].mxu0
    %v696 = vadd.f32 %v460, %v695
    %v697 = vpop.f32.mrb[0].mxu0
    %v698 = vadd.f32 %v464, %v697
    %699 = vdwg.mxu0
    %v700 = vmax.f32 %v662, 0.0
    %v701 = vmax.f32 %v664, 0.0
    %v702 = vmax.f32 %v666, 0.0
    %v703 = vmax.f32 %v668, 0.0
    %v704 = vmax.f32 %v672, 0.0
    %v705 = vmax.f32 %v674, 0.0
    %v706 = vmax.f32 %v676, 0.0
    %v707 = vmax.f32 %v678, 0.0
    %v708 = vmax.f32 %v682, 0.0
    %v709 = vmax.f32 %v684, 0.0
    %v710 = vmax.f32 %v686, 0.0
    %v711 = vmax.f32 %v688, 0.0
    %v712 = vmax.f32 %v692, 0.0
    %v713 = vmax.f32 %v694, 0.0
    %v714 = vmax.f32 %v696, 0.0
    %v715 = vmax.f32 %v698, 0.0
    %v716 = vpack.c.bf16 %v702, %v700
    %v717 = vpack.c.bf16 %v703, %v701
    %v718 = vpack.c.bf16 %v706, %v704
    %v719 = vpack.c.bf16 %v707, %v705
    %v720 = vpack.c.bf16 %v710, %v708
    %v721 = vpack.c.bf16 %v711, %v709
    %v722 = vpack.c.bf16 %v714, %v712
    %v723 = vpack.c.bf16 %v715, %v713
    %v724 = vld [vmem:[%s5] sm:$0xf]
    %v725 = vld [vmem:[%s5 + $0x4] sm:$0xf]
    %v726 = vld [vmem:[%s5 + $0x8] sm:$0xf]
    %v727 = vld [vmem:[%s5 + $0xc] sm:$0xf]
    %v728 = vld [vmem:[%s5 + $0x10] sm:$0xf]
    %v729 = vld [vmem:[%s5 + $0x14] sm:$0xf]
    %v730 = vld [vmem:[%s5 + $0x18] sm:$0xf]
    %v731 = vld [vmem:[%s5 + $0x1c] sm:$0xf]
    %v732 = vld [vmem:[%s5 + $0x20] sm:$0xf]
    %v733 = vld [vmem:[%s5 + $0x24] sm:$0xf]
    %v734 = vld [vmem:[%s5 + $0x28] sm:$0xf]
    %v735 = vld [vmem:[%s5 + $0x2c] sm:$0xf]
    %v736 = vld [vmem:[%s5 + $0x30] sm:$0xf]
    %v737 = vld [vmem:[%s5 + $0x34] sm:$0xf]
    %v738 = vld [vmem:[%s5 + $0x38] sm:$0xf]
    %v739 = vld [vmem:[%s5 + $0x3c] sm:$0xf]
    %v740 = vld [vmem:[%s5 + $0x40] sm:$0xf]
    %v741 = vld [vmem:[%s5 + $0x44] sm:$0xf]
    %v742 = vld [vmem:[%s5 + $0x48] sm:$0xf]
    %v743 = vld [vmem:[%s5 + $0x4c] sm:$0xf]
    %v744 = vld [vmem:[%s5 + $0x50] sm:$0xf]
    %v745 = vld [vmem:[%s5 + $0x54] sm:$0xf]
    %v746 = vld [vmem:[%s5 + $0x58] sm:$0xf]
    %v747 = vld [vmem:[%s5 + $0x5c] sm:$0xf]
    %v748 = vld [vmem:[%s5 + $0x60] sm:$0xf]
    %v749 = vld [vmem:[%s5 + $0x64] sm:$0xf]
    %v750 = vld [vmem:[%s5 + $0x68] sm:$0xf]
    %v751 = vld [vmem:[%s5 + $0x6c] sm:$0xf]
    %v752 = vld [vmem:[%s5 + $0x70] sm:$0xf]
    %v753 = vld [vmem:[%s5 + $0x74] sm:$0xf]
    %v754 = vld [vmem:[%s5 + $0x78] sm:$0xf]
    %v755 = vld [vmem:[%s5 + $0x7c] sm:$0xf]
    %v756 = vld [vmem:[%s6] sm:$0x1]
    %v758 = vlaneseq
    %v759 = vshrl.u32 %v758, 7
    %v760 = vsub.s32 0, %v759
    %v761 = vrot.slane %v756, %v760
    %v795 = vunpack.c.l.b16 %v724
    %v796 = vunpack.c.l.b16 %v725
    %v797 = vunpack.c.l.b16 %v726
    %v798 = vunpack.c.l.b16 %v727
    %v799 = vunpack.c.l.b16 %v728
    %v800 = vunpack.c.l.b16 %v729
    %v801 = vunpack.c.l.b16 %v730
    %v802 = vunpack.c.l.b16 %v731
    %v803 = vunpack.c.l.b16 %v732
    %v804 = vunpack.c.l.b16 %v733
    %v805 = vunpack.c.l.b16 %v734
    %v806 = vunpack.c.l.b16 %v735
    %v807 = vunpack.c.l.b16 %v736
    %v808 = vunpack.c.l.b16 %v737
    %v809 = vunpack.c.l.b16 %v738
    %v810 = vunpack.c.l.b16 %v739
    %v811 = vunpack.c.l.b16 %v740
    %v812 = vunpack.c.l.b16 %v741
    %v813 = vunpack.c.l.b16 %v742
    %v814 = vunpack.c.l.b16 %v743
    %v815 = vunpack.c.l.b16 %v744
    %v816 = vunpack.c.l.b16 %v745
    %v817 = vunpack.c.l.b16 %v746
    %v818 = vunpack.c.l.b16 %v747
    %v819 = vunpack.c.l.b16 %v748
    %v820 = vunpack.c.l.b16 %v749
    %v821 = vunpack.c.l.b16 %v750
    %v822 = vunpack.c.l.b16 %v751
    %v823 = vunpack.c.l.b16 %v752
    %v824 = vunpack.c.l.b16 %v753
    %v825 = vunpack.c.l.b16 %v754
    %v826 = vunpack.c.l.b16 %v755
    %v827 = vpack.c.b16 %v796, %v795
    %v828 = vpack.c.b16 %v798, %v797
    %v829 = vpack.c.b16 %v800, %v799
    %v830 = vpack.c.b16 %v802, %v801
    %v831 = vpack.c.b16 %v804, %v803
    %v832 = vpack.c.b16 %v806, %v805
    %v833 = vpack.c.b16 %v808, %v807
    %v834 = vpack.c.b16 %v810, %v809
    %v835 = vpack.c.b16 %v812, %v811
    %v836 = vpack.c.b16 %v814, %v813
    %v837 = vpack.c.b16 %v816, %v815
    %v838 = vpack.c.b16 %v818, %v817
    %v839 = vpack.c.b16 %v820, %v819
    %v840 = vpack.c.b16 %v822, %v821
    %v841 = vpack.c.b16 %v824, %v823
    %v842 = vpack.c.b16 %v826, %v825
    %859 = vmatprep.subr.bf16.mxu0 0
    %860 = vmatpush1.bf16.msra.mxu0 %v827
    %861 = vmatprep.subr.bf16.mxu0 0
    %862 = vmatpush1.bf16.msra.mxu0 %v828
    %863 = vmatprep.subr.bf16.mxu0 0
    %864 = vmatpush1.bf16.msra.mxu0 %v829
    %865 = vmatprep.subr.bf16.mxu0 0
    %866 = vmatpush1.bf16.msra.mxu0 %v830
    %867 = vmatprep.subr.bf16.mxu0 0
    %868 = vmatpush1.bf16.msra.mxu0 %v831
    %869 = vmatprep.subr.bf16.mxu0 0
    %870 = vmatpush1.bf16.msra.mxu0 %v832
    %871 = vmatprep.subr.bf16.mxu0 0
    %872 = vmatpush1.bf16.msra.mxu0 %v833
    %873 = vmatprep.subr.bf16.mxu0 0
    %874 = vmatpush1.bf16.msra.mxu0 %v834
    %875 = vmatprep.subr.bf16.mxu0 0
    %876 = vmatpush1.bf16.msra.mxu0 %v835
    %877 = vmatprep.subr.bf16.mxu0 0
    %878 = vmatpush1.bf16.msra.mxu0 %v836
    %879 = vmatprep.subr.bf16.mxu0 0
    %880 = vmatpush1.bf16.msra.mxu0 %v837
    %881 = vmatprep.subr.bf16.mxu0 0
    %882 = vmatpush1.bf16.msra.mxu0 %v838
    %883 = vmatprep.subr.bf16.mxu0 0
    %884 = vmatpush1.bf16.msra.mxu0 %v839
    %885 = vmatprep.subr.bf16.mxu0 0
    %886 = vmatpush1.bf16.msra.mxu0 %v840
    %887 = vmatprep.subr.bf16.mxu0 0
    %888 = vmatpush1.bf16.msra.mxu0 %v841
    %889 = vmatprep.subr.bf16.mxu0 0
    %890 = vmatpush1.bf16.msra.mxu0 %v842
    %891 = vmatprep.mubr.bf16.mxu0 %v717
    %892 = vmatmul.mubr.bf16.gmra.mrb[0].mxu0 %v716
    %v893 = vpop.f32.mrb[0].mxu0
    %v894 = vadd.f32 %v761, %v893
    %v895 = vpop.f32.mrb[0].mxu0
    %v896 = vpop.f32.mrb[0].mxu0
    %v897 = vadd.f32 %v761, %v896
    %v898 = vpop.f32.mrb[0].mxu0
    %899 = vmatprep.mubr.bf16.mxu0 %v719
    %900 = vmatmul.mubr.bf16.gmra.mrb[0].mxu0 %v718
    %v901 = vpop.f32.mrb[0].mxu0
    %v902 = vadd.f32 %v761, %v901
    %v903 = vpop.f32.mrb[0].mxu0
    %v904 = vpop.f32.mrb[0].mxu0
    %v905 = vadd.f32 %v761, %v904
    %v906 = vpop.f32.mrb[0].mxu0
    %907 = vmatprep.mubr.bf16.mxu0 %v721
    %908 = vmatmul.mubr.bf16.gmra.mrb[0].mxu0 %v720
    %v909 = vpop.f32.mrb[0].mxu0
    %v910 = vadd.f32 %v761, %v909
    %v911 = vpop.f32.mrb[0].mxu0
    %v912 = vpop.f32.mrb[0].mxu0
    %v913 = vadd.f32 %v761, %v912
    %v914 = vpop.f32.mrb[0].mxu0
    %915 = vmatprep.mubr.bf16.mxu0 %v723
    %916 = vmatmul.mubr.bf16.gmra.mrb[0].mxu0 %v722
    %v917 = vpop.f32.mrb[0].mxu0
    %v918 = vadd.f32 %v761, %v917
    %v919 = vpop.f32.mrb[0].mxu0
    %v920 = vpop.f32.mrb[0].mxu0
    %v921 = vadd.f32 %v761, %v920
    %v922 = vpop.f32.mrb[0].mxu0
    %923 = vdwg.mxu0
    %vm924 = vcmask 31744
    %925 = vst.msk [vmem:[%s7] sm:$0xff] %vm924, %v894
    %926 = vst.msk [vmem:[%s7 + $0x8] sm:$0xff] %vm924, %v897
    %927 = vst.msk [vmem:[%s7 + $0x10] sm:$0xff] %vm924, %v902
    %928 = vst.msk [vmem:[%s7 + $0x18] sm:$0xff] %vm924, %v905
    %929 = vst.msk [vmem:[%s7 + $0x20] sm:$0xff] %vm924, %v910
    %930 = vst.msk [vmem:[%s7 + $0x28] sm:$0xff] %vm924, %v913
    %931 = vst.msk [vmem:[%s7 + $0x30] sm:$0xff] %vm924, %v918
    %932 = vst.msk [vmem:[%s7 + $0x38] sm:$0xff] %vm924, %v921
    // Predicated region
    $region34: #{tpu_custom_call.1} parent=1 // pred_check
      _
    $region35: #{tpu_custom_call.1} parent=1 // pred_check_branch
      %934 = sbr.rel (0) target = $region37
    $region36: #{tpu_custom_call.1} parent=1 // pred_region
      _
    $region37: #{tpu_custom_call.1} parent=1 // pred_fallthru
      _
    // Predicated region
    $region38: #{tpu_custom_call.1} parent=1 // pred_check
      _
    $region39: #{tpu_custom_call.1} parent=1 // pred_check_branch
      %936 = sbr.rel (0) target = $region41
    $region40: #{tpu_custom_call.1} parent=1 // pred_region
      _
    $region41: #{tpu_custom_call.1} parent=1 // pred_fallthru
      _
    %937 = vsyncpa [#allocation3], 1

</llo_original>
